<compile_context>
chip_gen: v5e
topology: v5e:2x2
jax: 0.10.0
libtpu: 0.0.40
codegen_flags: <defaults>
</compile_context>

<pallas_src>
import functools

import jax
import jax.numpy as jnp
from jax.experimental import pallas as pl
from jax.experimental.pallas import tpu as pltpu


def _hloss_kernel(x_ref, o_ref, acc_ref, *, tile_rows, valid_rows,
                  tiles_per_chunk, need_mask):
    c = pl.program_id(0)          # chunk axis ("parallel"; 2 TCs on v7x)
    i = pl.program_id(1)          # row-tile within chunk ("arbitrary" reduction)

    @pl.when(i == 0)
    def _():
        acc_ref[...] = jnp.zeros_like(acc_ref)

    x = x_ref[...].astype(jnp.float32)                       # (tile_rows, N)

    if need_mask:
        # Global row index of this tile's rows (uses the UNCLAMPED tile index so
        # duplicated / out-of-range tiles contribute exactly zero).
        row0 = (c * tiles_per_chunk + i) * tile_rows
        rid = row0 + jax.lax.broadcasted_iota(jnp.int32, (tile_rows, 1), 0)
        rmask = rid < valid_rows
        # Clamp garbage rows BEFORE exp so NaN/Inf never propagates.
        x = jnp.where(rmask, x, 0.0)

    # Row-wise identity: sum(p * log p) = sum(e*s)/z - log(z),
    # with s = x - max(x), e = exp(s), z = sum(e).
    mx = jnp.max(x, axis=-1, keepdims=True)
    s = x - mx
    e = jnp.exp(s)
    z = jnp.sum(e, axis=-1, keepdims=True)
    t = jnp.sum(e * s, axis=-1, keepdims=True)
    contrib = t * pl.reciprocal(z, approx=False) - jnp.log(z)  # (tile_rows, 1)

    if need_mask:
        contrib = jnp.where(rmask, contrib, 0.0)

    acc_ref[...] += contrib

    # Epilogue: one cross-lane reduce + one lane-dense block store per chunk.
    @pl.when(i == pl.num_programs(1) - 1)
    def _():
        total = jnp.sum(acc_ref[...])
        o_ref[...] = jnp.full(o_ref.shape, total, dtype=jnp.float32)


def hloss(x, *, target_tile_bytes=2 * 1024 * 1024, num_chunks=2):
    """sum(softmax(x, -1) * log_softmax(x, -1)) over ALL elements (scalar)."""
    orig_dtype = x.dtype
    n = x.shape[-1]
    x2 = x.reshape(-1, n)
    m_rows = x2.shape[0]
    itemsize = x2.dtype.itemsize

    # Sublane tiling multiple for the *native* dtype (f32: 8, bf16: 16, int8: 32).
    row_mult = max(8, 32 // itemsize)

    # Rows per tile bounded by a per-buffer VMEM budget (input DMA'd in native dtype).
    rows_budget = max(row_mult,
                      (target_tile_bytes // max(1, n * itemsize)) // row_mult * row_mult)
    if m_rows <= row_mult:
        tile_rows = m_rows                      # full-extent block (always legal)
    else:
        tile_rows = min(rows_budget, (m_rows // row_mult) * row_mult)

    num_tiles = pl.cdiv(m_rows, tile_rows)
    chunks = max(1, min(num_chunks, num_tiles))  # leading "parallel" axis (v7x: 2 TCs)
    tiles_per_chunk = pl.cdiv(num_tiles, chunks)
    # Mask needed iff the grid over-covers the rows (partial boundary tile and/or
    # clamped duplicate tiles on the last chunk).
    need_mask = (chunks * tiles_per_chunk * tile_rows != m_rows)

    kernel = functools.partial(
        _hloss_kernel, tile_rows=tile_rows, valid_rows=m_rows,
        tiles_per_chunk=tiles_per_chunk, need_mask=need_mask)

    def in_map(c, i):
        # Clamp so the block index is always valid; over-shoot tiles are fully
        # masked inside the kernel (they use the unclamped global row index).
        return (jnp.minimum(c * tiles_per_chunk + i, num_tiles - 1), 0)

    # NOTE: for very small N (e.g. N=16) only N of 128 lanes carry data; lane
    # packing (8 softmax groups per vreg row) would need an in-kernel relayout
    # and is intentionally not done here.
    elems = m_rows * n
    cost = pl.CostEstimate(
        flops=6 * elems,
        transcendentals=elems + m_rows,
        bytes_accessed=elems * itemsize + chunks * 8 * 128 * 4)

    out = pl.pallas_call(
        kernel,
        out_shape=jax.ShapeDtypeStruct((chunks, 8, 128), jnp.float32),
        grid_spec=pltpu.PrefetchScalarGridSpec(
            num_scalar_prefetch=0,
            grid=(chunks, tiles_per_chunk),
            in_specs=[pl.BlockSpec((tile_rows, n), in_map)],
            out_specs=pl.BlockSpec((1, 8, 128), lambda c, i: (c, 0, 0)),
            scratch_shapes=[pltpu.VMEM((tile_rows, 1), jnp.float32)],
        ),
        compiler_params=pltpu.CompilerParams(
            dimension_semantics=("parallel", "arbitrary"),
            vmem_limit_bytes=48 * 1024 * 1024,
        ),
        cost_estimate=cost,
    )(x2)

    return jnp.sum(out[:, 0, 0]).astype(orig_dtype)


def hloss_ref(x):
    xf = x.astype(jnp.float32)
    b = jax.nn.softmax(xf, axis=-1) * jax.nn.log_softmax(xf, axis=-1)
    return jnp.sum(b).astype(x.dtype)


if __name__ == "__main__":
    key = jax.random.PRNGKey(0)
    k1, k2, k3 = jax.random.split(key, 3)

    # Primary shape consistent with the module's forward (softmax over last axis).
    x1 = jax.random.normal(k1, (2, 4, 16, 16), dtype=jnp.float32)
    out1 = jax.block_until_ready(hloss(x1))
    ref1 = jax.block_until_ready(hloss_ref(x1))
    assert jnp.allclose(out1, ref1, rtol=1e-4, atol=1e-4), (out1, ref1)

    # Ragged row count -> exercises the in-kernel partial-tile mask (no host pad).
    x2 = jax.random.normal(k2, (3, 5, 20), dtype=jnp.float32)
    out2 = jax.block_until_ready(hloss(x2))
    ref2 = jax.block_until_ready(hloss_ref(x2))
    assert jnp.allclose(out2, ref2, rtol=1e-4, atol=1e-4), (out2, ref2)

    # Many tiles + 2-way chunking + clamped overshoot tiles on the last chunk.
    x3 = jax.random.normal(k3, (23, 40), dtype=jnp.float32)
    out3 = jax.block_until_ready(hloss(x3, target_tile_bytes=8 * 40 * 4))
    ref3 = jax.block_until_ready(hloss_ref(x3))
    assert jnp.allclose(out3, ref3, rtol=1e-4, atol=1e-4), (out3, ref3)

    print("KERNEL_OK")
</pallas_src>

<mosaic_0001>
module attributes {stable_mosaic.version = 11 : i64} {
  func.func @_hloss_kernel(%arg0: i32, %arg1: i32, %arg2: memref<128x16xf32, #tpu.memory_space<vmem>>, %arg3: memref<1x8x128xf32, #tpu.memory_space<vmem>>, %arg4: memref<128x1xf32, #tpu.memory_space<vmem>>) attributes {dimension_semantics = [#tpu.dimension_semantics<parallel>, #tpu.dimension_semantics<arbitrary>], iteration_bounds = array<i64: 1, 1>, scalar_prefetch = 0 : i64, scratch_operands = 1 : i64, tpu.core_type = #tpu.core_type<tc>, window_params = [{transform_indices = @transform_0, window_bounds = array<i64: 128, 16>}, {transform_indices = @transform_1, window_bounds = array<i64: 1, 8, 128>}]} {
    %c0_i32 = arith.constant 0 : i32
    %0 = arith.cmpi eq, %arg1, %c0_i32 : i32
    %1 = arith.extui %0 : i1 to i32
    %c0_i32_0 = arith.constant 0 : i32
    %2 = arith.cmpi ne, %1, %c0_i32_0 : i32
    scf.if %2 {
      %cst_10 = arith.constant 0.000000e+00 : f32
      %24 = vector.broadcast %cst_10 : f32 to vector<128x1xf32>
      %c0_11 = arith.constant 0 : index
      %c0_12 = arith.constant 0 : index
      %25 = vector.load %arg4[%c0_11, %c0_12] : memref<128x1xf32, #tpu.memory_space<vmem>>, vector<128x1xf32>
      tpu.vector_store %arg4[%c0_11, %c0_12], %24 {strides = array<i32>} : memref<128x1xf32, #tpu.memory_space<vmem>>, vector<128x1xf32>,
    } else {
    }
    %c0 = arith.constant 0 : index
    %c0_1 = arith.constant 0 : index
    %3 = vector.load %arg2[%c0, %c0_1] : memref<128x16xf32, #tpu.memory_space<vmem>>, vector<128x16xf32>
    %cst = arith.constant dense<0xFF800000> : vector<128xf32>
    %4 = vector.multi_reduction <maximumf>, %3, %cst [1] : vector<128x16xf32> to vector<128xf32>
    %5 = vector.shape_cast %4 : vector<128xf32> to vector<128x1xf32>
    %6 = vector.broadcast %5 : vector<128x1xf32> to vector<128x16xf32>
    %7 = arith.subf %3, %6 : vector<128x16xf32>
    %8 = math.exp %7 : vector<128x16xf32>
    %cst_2 = arith.constant dense<0.000000e+00> : vector<128xf32>
    %9 = vector.multi_reduction <add>, %8, %cst_2 [1] : vector<128x16xf32> to vector<128xf32>
    %10 = vector.shape_cast %9 : vector<128xf32> to vector<128x1xf32>
    %11 = arith.mulf %8, %7 : vector<128x16xf32>
    %cst_3 = arith.constant dense<0.000000e+00> : vector<128xf32>
    %12 = vector.multi_reduction <add>, %11, %cst_3 [1] : vector<128x16xf32> to vector<128xf32>
    %13 = vector.shape_cast %12 : vector<128xf32> to vector<128x1xf32>
    %14 = tpu.reciprocal %10 : vector<128x1xf32> -> vector<128x1xf32>
    %15 = arith.mulf %13, %14 : vector<128x1xf32>
    %16 = math.log %10 : vector<128x1xf32>
    %17 = arith.subf %15, %16 : vector<128x1xf32>
    %c0_4 = arith.constant 0 : index
    %c0_5 = arith.constant 0 : index
    %18 = vector.load %arg4[%c0_4, %c0_5] : memref<128x1xf32, #tpu.memory_space<vmem>>, vector<128x1xf32>
    %19 = arith.addf %18, %17 : vector<128x1xf32>
    %c0_6 = arith.constant 0 : index
    %c0_7 = arith.constant 0 : index
    %20 = vector.load %arg4[%c0_6, %c0_7] : memref<128x1xf32, #tpu.memory_space<vmem>>, vector<128x1xf32>
    tpu.vector_store %arg4[%c0_6, %c0_7], %19 {strides = array<i32>} : memref<128x1xf32, #tpu.memory_space<vmem>>, vector<128x1xf32>,
    %c0_i32_8 = arith.constant 0 : i32
    %21 = arith.cmpi eq, %arg1, %c0_i32_8 : i32
    %22 = arith.extui %21 : i1 to i32
    %c0_i32_9 = arith.constant 0 : i32
    %23 = arith.cmpi ne, %22, %c0_i32_9 : i32
    scf.if %23 {
      %c0_10 = arith.constant 0 : index
      %c0_11 = arith.constant 0 : index
      %24 = vector.load %arg4[%c0_10, %c0_11] : memref<128x1xf32, #tpu.memory_space<vmem>>, vector<128x1xf32>
      %25 = vector.shape_cast %24 : vector<128x1xf32> to vector<1x128x1xf32>
      %cst_12 = arith.constant dense<0.000000e+00> : vector<1xf32>
      %26 = vector.multi_reduction <add>, %25, %cst_12 [1, 2] : vector<1x128x1xf32> to vector<1xf32>
      %27 = vector.shape_cast %26 : vector<1xf32> to vector<1x1x1xf32>
      %28 = vector.extract %27[0, 0, 0] : f32 from vector<1x1x1xf32>
      %29 = vector.broadcast %28 : f32 to vector<1x8x128xf32>
      %c0_13 = arith.constant 0 : index
      %c0_14 = arith.constant 0 : index
      %c0_15 = arith.constant 0 : index
      %30 = vector.load %arg3[%c0_13, %c0_14, %c0_15] : memref<1x8x128xf32, #tpu.memory_space<vmem>>, vector<1x8x128xf32>
      tpu.vector_store %arg3[%c0_13, %c0_14, %c0_15], %29 {strides = array<i32>} : memref<1x8x128xf32, #tpu.memory_space<vmem>>, vector<1x8x128xf32>,
    } else {
    }
    return
  }
  func.func @transform_0(%arg0: i32, %arg1: i32) -> (i32, i32) {
    %c1_i32 = arith.constant 1 : i32
    %0 = arith.muli %arg0, %c1_i32 : i32
    %1 = arith.addi %0, %arg1 : i32
    %c0_i32 = arith.constant 0 : i32
    %2 = arith.minsi %1, %c0_i32 : i32
    %c0_i32_0 = arith.constant 0 : i32
    %c0_i32_1 = arith.constant 0 : i32
    return %2, %c0_i32_0 : i32, i32
  }
  func.func @transform_1(%arg0: i32, %arg1: i32) -> (i32, i32, i32) {
    %c0_i32 = arith.constant 0 : i32
    %c0_i32_0 = arith.constant 0 : i32
    %c0_i32_1 = arith.constant 0 : i32
    return %arg0, %c0_i32, %c0_i32_0 : i32, i32, i32
  }
}

</mosaic_0001>

<llo_original>
// kernel: tpu_custom_call.1
$region0: #{tpu_custom_call.1}
  #allocation0 [shape = 'u32[]', space=smem, size = 0x4, offset = 0x4, fixed_abs, tag = 'smem constant byte address 0x4 - core index']
  #allocation1 [shape = 'u32[72,128]{1,0:T(1,128)}', space=vmem, size = 0x9000, scoped, tag = 'internal scratch']
  #allocation2 [shape = 'f32[128,1]{1,0:T(8,128)}', space=vmem, size = 0x10000, scoped, tag = 'scratch operand']
  %s0 = inlined_call_operand.vmem [shape: f32[128,16], index: 0, kind: input, shape index: {}]
  %s1 = inlined_call_operand.hbm [shape: f32[1,8,128], index: 1, kind: output, shape index: {}]
  %s2 = sld [smem:[#allocation0]]
  $region22: #{tpu_custom_call.1} parent=0
    _
  %s4 = ssub.s32 1, %s2
  %s5 = scalar_select 0, %s4, %s2
  $region1: #{tpu_custom_call.1} parent=0
    #allocation3 [shape = 'u8[4096]{0}', space=vmem, size = 0x1000, scoped, tag = 'output window, operand 0, single buffered']
    #allocation4 [shape = 's32[1]{0}', space=sflag, size = 0x4, scoped, tag = 'scoped memory for tpu_custom_call.1']
    %6 = vsyncpa [#allocation4], 0
    // Predicated region
    $region2: #{tpu_custom_call.1} parent=1 // pred_check
      _
    $region3: #{tpu_custom_call.1} parent=1 // pred_check_branch
      %8 = sbr.rel (0) target = $region5
    $region4: #{tpu_custom_call.1} parent=1 // pred_region
      %s9 = sadd.s32 0, 0
      %p10 = scmp.lt.s32.totalorder %s9, 0
      %s11 = scalar_select %p10, %s9, 0
      %s12 = smul.u32 16, %s11
      %p13 = scmp.lt.s32.totalorder %s12, 15
      %s14 = scalar_select %p13, %s12, 15
      %s15 = smul.addr %s14, 8
      %s16 = scalar_lea.vmem %s0, %s15
      %s17 = sadd.s32 0, 0
      %p18 = scmp.lt.s32.totalorder %s17, 0
      %s19 = scalar_select %p18, %s17, 0
      %s20 = smul.u32 16, %s19
    $region5: #{tpu_custom_call.1} parent=1 // pred_fallthru
      _
    %s21 = sadd.s32 0, 0
    %p22 = scmp.lt.s32.totalorder %s21, 0
    %s23 = scalar_select %p22, %s21, 0
    %s24 = smul.u32 16, %s23
    %p25 = scmp.lt.s32.totalorder %s24, 15
    %s26 = scalar_select %p25, %s24, 15
    %s27 = smul.addr %s26, 8
    %s28 = scalar_lea.vmem %s0, %s27
    %s29 = sadd.s32 0, 0
    %p30 = scmp.lt.s32.totalorder %s29, 0
    %s31 = scalar_select %p30, %s29, 0
    %s32 = smul.u32 16, %s31
    %p33 = scmp.lt.s32.totalorder %s32, 15
    %s34 = scalar_select %p33, %s32, 15
    %s35 = smul.addr %s34, 8
    %s36 = scalar_lea.vmem %s0, %s35
    %s37 = sadd.s32 0, 0
    %p38 = scmp.lt.s32.totalorder %s37, 0
    %s39 = scalar_select %p38, %s37, 0
    %s40 = smul.u32 16, %s39
    %p41 = scmp.eq.s32.totalorder 0, 0
    // Predicated region
    $region6: #{tpu_custom_call.1} parent=1 // pred_check
      %p42 = pneg %p41
    $region7: #{tpu_custom_call.1} parent=1 // pred_check_branch
      %44 = sbr.rel (%p42) target = $region9
    $region8: #{tpu_custom_call.1} parent=1 // pred_region
      %vm45 = vcmask 7168
      %46 = vst.msk [vmem:[#allocation2] sm:$0xff] %vm45, 0.0
      %47 = vst.msk [vmem:[#allocation2 + $0x8] sm:$0xff] %vm45, 0.0
      %48 = vst.msk [vmem:[#allocation2 + $0x10] sm:$0xff] %vm45, 0.0
      %49 = vst.msk [vmem:[#allocation2 + $0x18] sm:$0xff] %vm45, 0.0
      %50 = vst.msk [vmem:[#allocation2 + $0x20] sm:$0xff] %vm45, 0.0
      %51 = vst.msk [vmem:[#allocation2 + $0x28] sm:$0xff] %vm45, 0.0
      %52 = vst.msk [vmem:[#allocation2 + $0x30] sm:$0xff] %vm45, 0.0
      %53 = vst.msk [vmem:[#allocation2 + $0x38] sm:$0xff] %vm45, 0.0
      %54 = vst.msk [vmem:[#allocation2 + $0x40] sm:$0xff] %vm45, 0.0
      %55 = vst.msk [vmem:[#allocation2 + $0x48] sm:$0xff] %vm45, 0.0
      %56 = vst.msk [vmem:[#allocation2 + $0x50] sm:$0xff] %vm45, 0.0
      %57 = vst.msk [vmem:[#allocation2 + $0x58] sm:$0xff] %vm45, 0.0
      %58 = vst.msk [vmem:[#allocation2 + $0x60] sm:$0xff] %vm45, 0.0
      %59 = vst.msk [vmem:[#allocation2 + $0x68] sm:$0xff] %vm45, 0.0
      %60 = vst.msk [vmem:[#allocation2 + $0x70] sm:$0xff] %vm45, 0.0
      %61 = vst.msk [vmem:[#allocation2 + $0x78] sm:$0xff] %vm45, 0.0
    $region9: #{tpu_custom_call.1} parent=1 // pred_fallthru
      _
    %v62 = vld [vmem:[%s36] sm:$0xff]
    %v63 = vld [vmem:[%s36 + $0x8] sm:$0xff]
    %v64 = vld [vmem:[%s36 + $0x10] sm:$0xff]
    %v65 = vld [vmem:[%s36 + $0x18] sm:$0xff]
    %v66 = vld [vmem:[%s36 + $0x20] sm:$0xff]
    %v67 = vld [vmem:[%s36 + $0x28] sm:$0xff]
    %v68 = vld [vmem:[%s36 + $0x30] sm:$0xff]
    %v69 = vld [vmem:[%s36 + $0x38] sm:$0xff]
    %v70 = vld [vmem:[%s36 + $0x40] sm:$0xff]
    %v71 = vld [vmem:[%s36 + $0x48] sm:$0xff]
    %v72 = vld [vmem:[%s36 + $0x50] sm:$0xff]
    %v73 = vld [vmem:[%s36 + $0x58] sm:$0xff]
    %v74 = vld [vmem:[%s36 + $0x60] sm:$0xff]
    %v75 = vld [vmem:[%s36 + $0x68] sm:$0xff]
    %v76 = vld [vmem:[%s36 + $0x70] sm:$0xff]
    %v77 = vld [vmem:[%s36 + $0x78] sm:$0xff]
    %vm78 = vcmask 130048
    %v79 = vsel %vm78, %v62, -inf
    %80 = vmax.xlane.f32.xlu0 %v79
    %v81 = vpop.xlane.xlu0 %80
    %v82 = vsel %vm78, %v63, -inf
    %83 = vmax.xlane.f32.xlu0 %v82
    %v84 = vpop.xlane.xlu0 %83
    %v85 = vsel %vm78, %v64, -inf
    %86 = vmax.xlane.f32.xlu0 %v85
    %v87 = vpop.xlane.xlu0 %86
    %v88 = vsel %vm78, %v65, -inf
    %89 = vmax.xlane.f32.xlu0 %v88
    %v90 = vpop.xlane.xlu0 %89
    %v91 = vsel %vm78, %v66, -inf
    %92 = vmax.xlane.f32.xlu0 %v91
    %v93 = vpop.xlane.xlu0 %92
    %v94 = vsel %vm78, %v67, -inf
    %95 = vmax.xlane.f32.xlu0 %v94
    %v96 = vpop.xlane.xlu0 %95
    %v97 = vsel %vm78, %v68, -inf
    %98 = vmax.xlane.f32.xlu0 %v97
    %v99 = vpop.xlane.xlu0 %98
    %v100 = vsel %vm78, %v69, -inf
    %101 = vmax.xlane.f32.xlu0 %v100
    %v102 = vpop.xlane.xlu0 %101
    %v103 = vsel %vm78, %v70, -inf
    %104 = vmax.xlane.f32.xlu0 %v103
    %v105 = vpop.xlane.xlu0 %104
    %v106 = vsel %vm78, %v71, -inf
    %107 = vmax.xlane.f32.xlu0 %v106
    %v108 = vpop.xlane.xlu0 %107
    %v109 = vsel %vm78, %v72, -inf
    %110 = vmax.xlane.f32.xlu0 %v109
    %v111 = vpop.xlane.xlu0 %110
    %v112 = vsel %vm78, %v73, -inf
    %113 = vmax.xlane.f32.xlu0 %v112
    %v114 = vpop.xlane.xlu0 %113
    %v115 = vsel %vm78, %v74, -inf
    %116 = vmax.xlane.f32.xlu0 %v115
    %v117 = vpop.xlane.xlu0 %116
    %v118 = vsel %vm78, %v75, -inf
    %119 = vmax.xlane.f32.xlu0 %v118
    %v120 = vpop.xlane.xlu0 %119
    %v121 = vsel %vm78, %v76, -inf
    %122 = vmax.xlane.f32.xlu0 %v121
    %v123 = vpop.xlane.xlu0 %122
    %v124 = vsel %vm78, %v77, -inf
    %125 = vmax.xlane.f32.xlu0 %v124
    %v126 = vpop.xlane.xlu0 %125
    %v127 = vsub.f32 %v62, %v81
    %v128 = vsub.f32 %v63, %v84
    %v129 = vsub.f32 %v64, %v87
    %v130 = vsub.f32 %v65, %v90
    %v131 = vsub.f32 %v66, %v93
    %v132 = vsub.f32 %v67, %v96
    %v133 = vsub.f32 %v68, %v99
    %v134 = vsub.f32 %v69, %v102
    %v135 = vsub.f32 %v70, %v105
    %v136 = vsub.f32 %v71, %v108
    %v137 = vsub.f32 %v72, %v111
    %v138 = vsub.f32 %v73, %v114
    %v139 = vsub.f32 %v74, %v117
    %v140 = vsub.f32 %v75, %v120
    %v141 = vsub.f32 %v76, %v123
    %v142 = vsub.f32 %v77, %v126
    %v143 = vmul.f32 %v127, 1.442695
    %v144 = vpow.pop %v143
    %v145 = vmul.f32 %v128, 1.442695
    %v146 = vpow.pop %v145
    %v147 = vmul.f32 %v129, 1.442695
    %v148 = vpow.pop %v147
    %v149 = vmul.f32 %v130, 1.442695
    %v150 = vpow.pop %v149
    %v151 = vmul.f32 %v131, 1.442695
    %v152 = vpow.pop %v151
    %v153 = vmul.f32 %v132, 1.442695
    %v154 = vpow.pop %v153
    %v155 = vmul.f32 %v133, 1.442695
    %v156 = vpow.pop %v155
    %v157 = vmul.f32 %v134, 1.442695
    %v158 = vpow.pop %v157
    %v159 = vmul.f32 %v135, 1.442695
    %v160 = vpow.pop %v159
    %v161 = vmul.f32 %v136, 1.442695
    %v162 = vpow.pop %v161
    %v163 = vmul.f32 %v137, 1.442695
    %v164 = vpow.pop %v163
    %v165 = vmul.f32 %v138, 1.442695
    %v166 = vpow.pop %v165
    %v167 = vmul.f32 %v139, 1.442695
    %v168 = vpow.pop %v167
    %v169 = vmul.f32 %v140, 1.442695
    %v170 = vpow.pop %v169
    %v171 = vmul.f32 %v141, 1.442695
    %v172 = vpow.pop %v171
    %v173 = vmul.f32 %v142, 1.442695
    %v174 = vpow.pop %v173
    %v175 = vsel %vm78, %v144, 0.0
    %176 = vadd.xlane.f32.xlu0 %v175
    %v177 = vpop.xlane.xlu0 %176
    %v178 = vsel %vm78, %v146, 0.0
    %179 = vadd.xlane.f32.xlu0 %v178
    %v180 = vpop.xlane.xlu0 %179
    %v181 = vsel %vm78, %v148, 0.0
    %182 = vadd.xlane.f32.xlu0 %v181
    %v183 = vpop.xlane.xlu0 %182
    %v184 = vsel %vm78, %v150, 0.0
    %185 = vadd.xlane.f32.xlu0 %v184
    %v186 = vpop.xlane.xlu0 %185
    %v187 = vsel %vm78, %v152, 0.0
    %188 = vadd.xlane.f32.xlu0 %v187
    %v189 = vpop.xlane.xlu0 %188
    %v190 = vsel %vm78, %v154, 0.0
    %191 = vadd.xlane.f32.xlu0 %v190
    %v192 = vpop.xlane.xlu0 %191
    %v193 = vsel %vm78, %v156, 0.0
    %194 = vadd.xlane.f32.xlu0 %v193
    %v195 = vpop.xlane.xlu0 %194
    %v196 = vsel %vm78, %v158, 0.0
    %197 = vadd.xlane.f32.xlu0 %v196
    %v198 = vpop.xlane.xlu0 %197
    %v199 = vsel %vm78, %v160, 0.0
    %200 = vadd.xlane.f32.xlu0 %v199
    %v201 = vpop.xlane.xlu0 %200
    %v202 = vsel %vm78, %v162, 0.0
    %203 = vadd.xlane.f32.xlu0 %v202
    %v204 = vpop.xlane.xlu0 %203
    %v205 = vsel %vm78, %v164, 0.0
    %206 = vadd.xlane.f32.xlu0 %v205
    %v207 = vpop.xlane.xlu0 %206
    %v208 = vsel %vm78, %v166, 0.0
    %209 = vadd.xlane.f32.xlu0 %v208
    %v210 = vpop.xlane.xlu0 %209
    %v211 = vsel %vm78, %v168, 0.0
    %212 = vadd.xlane.f32.xlu0 %v211
    %v213 = vpop.xlane.xlu0 %212
    %v214 = vsel %vm78, %v170, 0.0
    %215 = vadd.xlane.f32.xlu0 %v214
    %v216 = vpop.xlane.xlu0 %215
    %v217 = vsel %vm78, %v172, 0.0
    %218 = vadd.xlane.f32.xlu0 %v217
    %v219 = vpop.xlane.xlu0 %218
    %v220 = vsel %vm78, %v174, 0.0
    %221 = vadd.xlane.f32.xlu0 %v220
    %v222 = vpop.xlane.xlu0 %221
    %v223 = vmul.f32 %v144, %v127
    %v224 = vmul.f32 %v146, %v128
    %v225 = vmul.f32 %v148, %v129
    %v226 = vmul.f32 %v150, %v130
    %v227 = vmul.f32 %v152, %v131
    %v228 = vmul.f32 %v154, %v132
    %v229 = vmul.f32 %v156, %v133
    %v230 = vmul.f32 %v158, %v134
    %v231 = vmul.f32 %v160, %v135
    %v232 = vmul.f32 %v162, %v136
    %v233 = vmul.f32 %v164, %v137
    %v234 = vmul.f32 %v166, %v138
    %v235 = vmul.f32 %v168, %v139
    %v236 = vmul.f32 %v170, %v140
    %v237 = vmul.f32 %v172, %v141
    %v238 = vmul.f32 %v174, %v142
    %v239 = vsel %vm78, %v223, 0.0
    %240 = vadd.xlane.f32.xlu0 %v239
    %v241 = vpop.xlane.xlu0 %240
    %v242 = vsel %vm78, %v224, 0.0
    %243 = vadd.xlane.f32.xlu0 %v242
    %v244 = vpop.xlane.xlu0 %243
    %v245 = vsel %vm78, %v225, 0.0
    %246 = vadd.xlane.f32.xlu0 %v245
    %v247 = vpop.xlane.xlu0 %246
    %v248 = vsel %vm78, %v226, 0.0
    %249 = vadd.xlane.f32.xlu0 %v248
    %v250 = vpop.xlane.xlu0 %249
    %v251 = vsel %vm78, %v227, 0.0
    %252 = vadd.xlane.f32.xlu0 %v251
    %v253 = vpop.xlane.xlu0 %252
    %v254 = vsel %vm78, %v228, 0.0
    %255 = vadd.xlane.f32.xlu0 %v254
    %v256 = vpop.xlane.xlu0 %255
    %v257 = vsel %vm78, %v229, 0.0
    %258 = vadd.xlane.f32.xlu0 %v257
    %v259 = vpop.xlane.xlu0 %258
    %v260 = vsel %vm78, %v230, 0.0
    %261 = vadd.xlane.f32.xlu0 %v260
    %v262 = vpop.xlane.xlu0 %261
    %v263 = vsel %vm78, %v231, 0.0
    %264 = vadd.xlane.f32.xlu0 %v263
    %v265 = vpop.xlane.xlu0 %264
    %v266 = vsel %vm78, %v232, 0.0
    %267 = vadd.xlane.f32.xlu0 %v266
    %v268 = vpop.xlane.xlu0 %267
    %v269 = vsel %vm78, %v233, 0.0
    %270 = vadd.xlane.f32.xlu0 %v269
    %v271 = vpop.xlane.xlu0 %270
    %v272 = vsel %vm78, %v234, 0.0
    %273 = vadd.xlane.f32.xlu0 %v272
    %v274 = vpop.xlane.xlu0 %273
    %v275 = vsel %vm78, %v235, 0.0
    %276 = vadd.xlane.f32.xlu0 %v275
    %v277 = vpop.xlane.xlu0 %276
    %v278 = vsel %vm78, %v236, 0.0
    %279 = vadd.xlane.f32.xlu0 %v278
    %v280 = vpop.xlane.xlu0 %279
    %v281 = vsel %vm78, %v237, 0.0
    %282 = vadd.xlane.f32.xlu0 %v281
    %v283 = vpop.xlane.xlu0 %282
    %v284 = vsel %vm78, %v238, 0.0
    %285 = vadd.xlane.f32.xlu0 %v284
    %v286 = vpop.xlane.xlu0 %285
    %v287 = vrcp.pop %v177
    %v288 = vmul.f32 %v177, %v287
    %v289 = vsub.f32 1.0, %v288
    %v290 = vmul.f32 %v287, %v289
    %v291 = vadd.f32 %v287, %v290
    %vm292 = vweird.f32 %v177
    %vm293 = vweird.f32 %v287
    %vm294 = vmor %vm292, %vm293
    %v295 = vsel %vm294, %v287, %v291
    %v296 = vand.u32 2147483647, %v177
    %vm297 = vcmp.eq.f32.partialorder %v296, 8.507059e+37
    %v298 = vand.u32 %v177, 2147483648
    %v299 = vor.u32 1.1754944e-38, %v298
    %v300 = vsel %vm297, %v299, %v295
    %v301 = vrcp.pop %v180
    %v302 = vmul.f32 %v180, %v301
    %v303 = vsub.f32 1.0, %v302
    %v304 = vmul.f32 %v301, %v303
    %v305 = vadd.f32 %v301, %v304
    %vm306 = vweird.f32 %v180
    %vm307 = vweird.f32 %v301
    %vm308 = vmor %vm306, %vm307
    %v309 = vsel %vm308, %v301, %v305
    %v310 = vand.u32 2147483647, %v180
    %vm311 = vcmp.eq.f32.partialorder %v310, 8.507059e+37
    %v312 = vand.u32 %v180, 2147483648
    %v313 = vor.u32 1.1754944e-38, %v312
    %v314 = vsel %vm311, %v313, %v309
    %v315 = vrcp.pop %v183
    %v316 = vmul.f32 %v183, %v315
    %v317 = vsub.f32 1.0, %v316
    %v318 = vmul.f32 %v315, %v317
    %v319 = vadd.f32 %v315, %v318
    %vm320 = vweird.f32 %v183
    %vm321 = vweird.f32 %v315
    %vm322 = vmor %vm320, %vm321
    %v323 = vsel %vm322, %v315, %v319
    %v324 = vand.u32 2147483647, %v183
    %vm325 = vcmp.eq.f32.partialorder %v324, 8.507059e+37
    %v326 = vand.u32 %v183, 2147483648
    %v327 = vor.u32 1.1754944e-38, %v326
    %v328 = vsel %vm325, %v327, %v323
    %v329 = vrcp.pop %v186
    %v330 = vmul.f32 %v186, %v329
    %v331 = vsub.f32 1.0, %v330
    %v332 = vmul.f32 %v329, %v331
    %v333 = vadd.f32 %v329, %v332
    %vm334 = vweird.f32 %v186
    %vm335 = vweird.f32 %v329
    %vm336 = vmor %vm334, %vm335
    %v337 = vsel %vm336, %v329, %v333
    %v338 = vand.u32 2147483647, %v186
    %vm339 = vcmp.eq.f32.partialorder %v338, 8.507059e+37
    %v340 = vand.u32 %v186, 2147483648
    %v341 = vor.u32 1.1754944e-38, %v340
    %v342 = vsel %vm339, %v341, %v337
    %v343 = vrcp.pop %v189
    %v344 = vmul.f32 %v189, %v343
    %v345 = vsub.f32 1.0, %v344
    %v346 = vmul.f32 %v343, %v345
    %v347 = vadd.f32 %v343, %v346
    %vm348 = vweird.f32 %v189
    %vm349 = vweird.f32 %v343
    %vm350 = vmor %vm348, %vm349
    %v351 = vsel %vm350, %v343, %v347
    %v352 = vand.u32 2147483647, %v189
    %vm353 = vcmp.eq.f32.partialorder %v352, 8.507059e+37
    %v354 = vand.u32 %v189, 2147483648
    %v355 = vor.u32 1.1754944e-38, %v354
    %v356 = vsel %vm353, %v355, %v351
    %v357 = vrcp.pop %v192
    %v358 = vmul.f32 %v192, %v357
    %v359 = vsub.f32 1.0, %v358
    %v360 = vmul.f32 %v357, %v359
    %v361 = vadd.f32 %v357, %v360
    %vm362 = vweird.f32 %v192
    %vm363 = vweird.f32 %v357
    %vm364 = vmor %vm362, %vm363
    %v365 = vsel %vm364, %v357, %v361
    %v366 = vand.u32 2147483647, %v192
    %vm367 = vcmp.eq.f32.partialorder %v366, 8.507059e+37
    %v368 = vand.u32 %v192, 2147483648
    %v369 = vor.u32 1.1754944e-38, %v368
    %v370 = vsel %vm367, %v369, %v365
    %v371 = vrcp.pop %v195
    %v372 = vmul.f32 %v195, %v371
    %v373 = vsub.f32 1.0, %v372
    %v374 = vmul.f32 %v371, %v373
    %v375 = vadd.f32 %v371, %v374
    %vm376 = vweird.f32 %v195
    %vm377 = vweird.f32 %v371
    %vm378 = vmor %vm376, %vm377
    %v379 = vsel %vm378, %v371, %v375
    %v380 = vand.u32 2147483647, %v195
    %vm381 = vcmp.eq.f32.partialorder %v380, 8.507059e+37
    %v382 = vand.u32 %v195, 2147483648
    %v383 = vor.u32 1.1754944e-38, %v382
    %v384 = vsel %vm381, %v383, %v379
    %v385 = vrcp.pop %v198
    %v386 = vmul.f32 %v198, %v385
    %v387 = vsub.f32 1.0, %v386
    %v388 = vmul.f32 %v385, %v387
    %v389 = vadd.f32 %v385, %v388
    %vm390 = vweird.f32 %v198
    %vm391 = vweird.f32 %v385
    %vm392 = vmor %vm390, %vm391
    %v393 = vsel %vm392, %v385, %v389
    %v394 = vand.u32 2147483647, %v198
    %vm395 = vcmp.eq.f32.partialorder %v394, 8.507059e+37
    %v396 = vand.u32 %v198, 2147483648
    %v397 = vor.u32 1.1754944e-38, %v396
    %v398 = vsel %vm395, %v397, %v393
    %v399 = vrcp.pop %v201
    %v400 = vmul.f32 %v201, %v399
    %v401 = vsub.f32 1.0, %v400
    %v402 = vmul.f32 %v399, %v401
    %v403 = vadd.f32 %v399, %v402
    %vm404 = vweird.f32 %v201
    %vm405 = vweird.f32 %v399
    %vm406 = vmor %vm404, %vm405
    %v407 = vsel %vm406, %v399, %v403
    %v408 = vand.u32 2147483647, %v201
    %vm409 = vcmp.eq.f32.partialorder %v408, 8.507059e+37
    %v410 = vand.u32 %v201, 2147483648
    %v411 = vor.u32 1.1754944e-38, %v410
    %v412 = vsel %vm409, %v411, %v407
    %v413 = vrcp.pop %v204
    %v414 = vmul.f32 %v204, %v413
    %v415 = vsub.f32 1.0, %v414
    %v416 = vmul.f32 %v413, %v415
    %v417 = vadd.f32 %v413, %v416
    %vm418 = vweird.f32 %v204
    %vm419 = vweird.f32 %v413
    %vm420 = vmor %vm418, %vm419
    %v421 = vsel %vm420, %v413, %v417
    %v422 = vand.u32 2147483647, %v204
    %vm423 = vcmp.eq.f32.partialorder %v422, 8.507059e+37
    %v424 = vand.u32 %v204, 2147483648
    %v425 = vor.u32 1.1754944e-38, %v424
    %v426 = vsel %vm423, %v425, %v421
    %v427 = vrcp.pop %v207
    %v428 = vmul.f32 %v207, %v427
    %v429 = vsub.f32 1.0, %v428
    %v430 = vmul.f32 %v427, %v429
    %v431 = vadd.f32 %v427, %v430
    %vm432 = vweird.f32 %v207
    %vm433 = vweird.f32 %v427
    %vm434 = vmor %vm432, %vm433
    %v435 = vsel %vm434, %v427, %v431
    %v436 = vand.u32 2147483647, %v207
    %vm437 = vcmp.eq.f32.partialorder %v436, 8.507059e+37
    %v438 = vand.u32 %v207, 2147483648
    %v439 = vor.u32 1.1754944e-38, %v438
    %v440 = vsel %vm437, %v439, %v435
    %v441 = vrcp.pop %v210
    %v442 = vmul.f32 %v210, %v441
    %v443 = vsub.f32 1.0, %v442
    %v444 = vmul.f32 %v441, %v443
    %v445 = vadd.f32 %v441, %v444
    %vm446 = vweird.f32 %v210
    %vm447 = vweird.f32 %v441
    %vm448 = vmor %vm446, %vm447
    %v449 = vsel %vm448, %v441, %v445
    %v450 = vand.u32 2147483647, %v210
    %vm451 = vcmp.eq.f32.partialorder %v450, 8.507059e+37
    %v452 = vand.u32 %v210, 2147483648
    %v453 = vor.u32 1.1754944e-38, %v452
    %v454 = vsel %vm451, %v453, %v449
    %v455 = vrcp.pop %v213
    %v456 = vmul.f32 %v213, %v455
    %v457 = vsub.f32 1.0, %v456
    %v458 = vmul.f32 %v455, %v457
    %v459 = vadd.f32 %v455, %v458
    %vm460 = vweird.f32 %v213
    %vm461 = vweird.f32 %v455
    %vm462 = vmor %vm460, %vm461
    %v463 = vsel %vm462, %v455, %v459
    %v464 = vand.u32 2147483647, %v213
    %vm465 = vcmp.eq.f32.partialorder %v464, 8.507059e+37
    %v466 = vand.u32 %v213, 2147483648
    %v467 = vor.u32 1.1754944e-38, %v466
    %v468 = vsel %vm465, %v467, %v463
    %v469 = vrcp.pop %v216
    %v470 = vmul.f32 %v216, %v469
    %v471 = vsub.f32 1.0, %v470
    %v472 = vmul.f32 %v469, %v471
    %v473 = vadd.f32 %v469, %v472
    %vm474 = vweird.f32 %v216
    %vm475 = vweird.f32 %v469
    %vm476 = vmor %vm474, %vm475
    %v477 = vsel %vm476, %v469, %v473
    %v478 = vand.u32 2147483647, %v216
    %vm479 = vcmp.eq.f32.partialorder %v478, 8.507059e+37
    %v480 = vand.u32 %v216, 2147483648
    %v481 = vor.u32 1.1754944e-38, %v480
    %v482 = vsel %vm479, %v481, %v477
    %v483 = vrcp.pop %v219
    %v484 = vmul.f32 %v219, %v483
    %v485 = vsub.f32 1.0, %v484
    %v486 = vmul.f32 %v483, %v485
    %v487 = vadd.f32 %v483, %v486
    %vm488 = vweird.f32 %v219
    %vm489 = vweird.f32 %v483
    %vm490 = vmor %vm488, %vm489
    %v491 = vsel %vm490, %v483, %v487
    %v492 = vand.u32 2147483647, %v219
    %vm493 = vcmp.eq.f32.partialorder %v492, 8.507059e+37
    %v494 = vand.u32 %v219, 2147483648
    %v495 = vor.u32 1.1754944e-38, %v494
    %v496 = vsel %vm493, %v495, %v491
    %v497 = vrcp.pop %v222
    %v498 = vmul.f32 %v222, %v497
    %v499 = vsub.f32 1.0, %v498
    %v500 = vmul.f32 %v497, %v499
    %v501 = vadd.f32 %v497, %v500
    %vm502 = vweird.f32 %v222
    %vm503 = vweird.f32 %v497
    %vm504 = vmor %vm502, %vm503
    %v505 = vsel %vm504, %v497, %v501
    %v506 = vand.u32 2147483647, %v222
    %vm507 = vcmp.eq.f32.partialorder %v506, 8.507059e+37
    %v508 = vand.u32 %v222, 2147483648
    %v509 = vor.u32 1.1754944e-38, %v508
    %v510 = vsel %vm507, %v509, %v505
    %v511 = vmul.f32 %v241, %v300
    %v512 = vmul.f32 %v244, %v314
    %v513 = vmul.f32 %v247, %v328
    %v514 = vmul.f32 %v250, %v342
    %v515 = vmul.f32 %v253, %v356
    %v516 = vmul.f32 %v256, %v370
    %v517 = vmul.f32 %v259, %v384
    %v518 = vmul.f32 %v262, %v398
    %v519 = vmul.f32 %v265, %v412
    %v520 = vmul.f32 %v268, %v426
    %v521 = vmul.f32 %v271, %v440
    %v522 = vmul.f32 %v274, %v454
    %v523 = vmul.f32 %v277, %v468
    %v524 = vmul.f32 %v280, %v482
    %v525 = vmul.f32 %v283, %v496
    %v526 = vmul.f32 %v286, %v510
    %v527 = vlog2.pop %v177
    %v528 = vmul.f32 %v527, 0.6931472
    %v529 = vlog2.pop %v180
    %v530 = vmul.f32 %v529, 0.6931472
    %v531 = vlog2.pop %v183
    %v532 = vmul.f32 %v531, 0.6931472
    %v533 = vlog2.pop %v186
    %v534 = vmul.f32 %v533, 0.6931472
    %v535 = vlog2.pop %v189
    %v536 = vmul.f32 %v535, 0.6931472
    %v537 = vlog2.pop %v192
    %v538 = vmul.f32 %v537, 0.6931472
    %v539 = vlog2.pop %v195
    %v540 = vmul.f32 %v539, 0.6931472
    %v541 = vlog2.pop %v198
    %v542 = vmul.f32 %v541, 0.6931472
    %v543 = vlog2.pop %v201
    %v544 = vmul.f32 %v543, 0.6931472
    %v545 = vlog2.pop %v204
    %v546 = vmul.f32 %v545, 0.6931472
    %v547 = vlog2.pop %v207
    %v548 = vmul.f32 %v547, 0.6931472
    %v549 = vlog2.pop %v210
    %v550 = vmul.f32 %v549, 0.6931472
    %v551 = vlog2.pop %v213
    %v552 = vmul.f32 %v551, 0.6931472
    %v553 = vlog2.pop %v216
    %v554 = vmul.f32 %v553, 0.6931472
    %v555 = vlog2.pop %v219
    %v556 = vmul.f32 %v555, 0.6931472
    %v557 = vlog2.pop %v222
    %v558 = vmul.f32 %v557, 0.6931472
    %v559 = vsub.f32 %v511, %v528
    %v560 = vsub.f32 %v512, %v530
    %v561 = vsub.f32 %v513, %v532
    %v562 = vsub.f32 %v514, %v534
    %v563 = vsub.f32 %v515, %v536
    %v564 = vsub.f32 %v516, %v538
    %v565 = vsub.f32 %v517, %v540
    %v566 = vsub.f32 %v518, %v542
    %v567 = vsub.f32 %v519, %v544
    %v568 = vsub.f32 %v520, %v546
    %v569 = vsub.f32 %v521, %v548
    %v570 = vsub.f32 %v522, %v550
    %v571 = vsub.f32 %v523, %v552
    %v572 = vsub.f32 %v524, %v554
    %v573 = vsub.f32 %v525, %v556
    %v574 = vsub.f32 %v526, %v558
    %v575 = vld [vmem:[#allocation2] sm:$0xff]
    %v576 = vld [vmem:[#allocation2 + $0x8] sm:$0xff]
    %v577 = vld [vmem:[#allocation2 + $0x10] sm:$0xff]
    %v578 = vld [vmem:[#allocation2 + $0x18] sm:$0xff]
    %v579 = vld [vmem:[#allocation2 + $0x20] sm:$0xff]
    %v580 = vld [vmem:[#allocation2 + $0x28] sm:$0xff]
    %v581 = vld [vmem:[#allocation2 + $0x30] sm:$0xff]
    %v582 = vld [vmem:[#allocation2 + $0x38] sm:$0xff]
    %v583 = vld [vmem:[#allocation2 + $0x40] sm:$0xff]
    %v584 = vld [vmem:[#allocation2 + $0x48] sm:$0xff]
    %v585 = vld [vmem:[#allocation2 + $0x50] sm:$0xff]
    %v586 = vld [vmem:[#allocation2 + $0x58] sm:$0xff]
    %v587 = vld [vmem:[#allocation2 + $0x60] sm:$0xff]
    %v588 = vld [vmem:[#allocation2 + $0x68] sm:$0xff]
    %v589 = vld [vmem:[#allocation2 + $0x70] sm:$0xff]
    %v590 = vld [vmem:[#allocation2 + $0x78] sm:$0xff]
    %v591 = vadd.f32 %v575, %v559
    %v592 = vadd.f32 %v576, %v560
    %v593 = vadd.f32 %v577, %v561
    %v594 = vadd.f32 %v578, %v562
    %v595 = vadd.f32 %v579, %v563
    %v596 = vadd.f32 %v580, %v564
    %v597 = vadd.f32 %v581, %v565
    %v598 = vadd.f32 %v582, %v566
    %v599 = vadd.f32 %v583, %v567
    %v600 = vadd.f32 %v584, %v568
    %v601 = vadd.f32 %v585, %v569
    %v602 = vadd.f32 %v586, %v570
    %v603 = vadd.f32 %v587, %v571
    %v604 = vadd.f32 %v588, %v572
    %v605 = vadd.f32 %v589, %v573
    %v606 = vadd.f32 %v590, %v574
    %vm607 = vcmask 7168
    %608 = vst.msk [vmem:[#allocation2] sm:$0xff] %vm607, %v591
    %609 = vst.msk [vmem:[#allocation2 + $0x8] sm:$0xff] %vm607, %v592
    %610 = vst.msk [vmem:[#allocation2 + $0x10] sm:$0xff] %vm607, %v593
    %611 = vst.msk [vmem:[#allocation2 + $0x18] sm:$0xff] %vm607, %v594
    %612 = vst.msk [vmem:[#allocation2 + $0x20] sm:$0xff] %vm607, %v595
    %613 = vst.msk [vmem:[#allocation2 + $0x28] sm:$0xff] %vm607, %v596
    %614 = vst.msk [vmem:[#allocation2 + $0x30] sm:$0xff] %vm607, %v597
    %615 = vst.msk [vmem:[#allocation2 + $0x38] sm:$0xff] %vm607, %v598
    %616 = vst.msk [vmem:[#allocation2 + $0x40] sm:$0xff] %vm607, %v599
    %617 = vst.msk [vmem:[#allocation2 + $0x48] sm:$0xff] %vm607, %v600
    %618 = vst.msk [vmem:[#allocation2 + $0x50] sm:$0xff] %vm607, %v601
    %619 = vst.msk [vmem:[#allocation2 + $0x58] sm:$0xff] %vm607, %v602
    %620 = vst.msk [vmem:[#allocation2 + $0x60] sm:$0xff] %vm607, %v603
    %621 = vst.msk [vmem:[#allocation2 + $0x68] sm:$0xff] %vm607, %v604
    %622 = vst.msk [vmem:[#allocation2 + $0x70] sm:$0xff] %vm607, %v605
    %623 = vst.msk [vmem:[#allocation2 + $0x78] sm:$0xff] %vm607, %v606
    // Predicated region
    $region10: #{tpu_custom_call.1} parent=1 // pred_check
      %p624 = pneg %p41
    $region11: #{tpu_custom_call.1} parent=1 // pred_check_branch
      %626 = sbr.rel (%p624) target = $region13
    $region12: #{tpu_custom_call.1} parent=1 // pred_region
      %v627 = vld [vmem:[#allocation2] sm:$0xff]
      %v628 = vld [vmem:[#allocation2 + $0x8] sm:$0xff]
      %v629 = vld [vmem:[#allocation2 + $0x10] sm:$0xff]
      %v630 = vld [vmem:[#allocation2 + $0x18] sm:$0xff]
      %v631 = vld [vmem:[#allocation2 + $0x20] sm:$0xff]
      %v632 = vld [vmem:[#allocation2 + $0x28] sm:$0xff]
      %v633 = vld [vmem:[#allocation2 + $0x30] sm:$0xff]
      %v634 = vld [vmem:[#allocation2 + $0x38] sm:$0xff]
      %v635 = vld [vmem:[#allocation2 + $0x40] sm:$0xff]
      %v636 = vld [vmem:[#allocation2 + $0x48] sm:$0xff]
      %v637 = vld [vmem:[#allocation2 + $0x50] sm:$0xff]
      %v638 = vld [vmem:[#allocation2 + $0x58] sm:$0xff]
      %v639 = vld [vmem:[#allocation2 + $0x60] sm:$0xff]
      %v640 = vld [vmem:[#allocation2 + $0x68] sm:$0xff]
      %v641 = vld [vmem:[#allocation2 + $0x70] sm:$0xff]
      %v642 = vld [vmem:[#allocation2 + $0x78] sm:$0xff]
      %v643 = vsel %vm607, %v627, 0.0
      %v644 = vsel %vm607, %v628, 0.0
      %v645 = vadd.f32 %v643, %v644
      %v646 = vsel %vm607, %v629, 0.0
      %v647 = vadd.f32 %v645, %v646
      %v648 = vsel %vm607, %v630, 0.0
      %v649 = vadd.f32 %v647, %v648
      %v650 = vsel %vm607, %v631, 0.0
      %v651 = vadd.f32 %v649, %v650
      %v652 = vsel %vm607, %v632, 0.0
      %v653 = vadd.f32 %v651, %v652
      %v654 = vsel %vm607, %v633, 0.0
      %v655 = vadd.f32 %v653, %v654
      %v656 = vsel %vm607, %v634, 0.0
      %v657 = vadd.f32 %v655, %v656
      %v658 = vsel %vm607, %v635, 0.0
      %v659 = vadd.f32 %v657, %v658
      %v660 = vsel %vm607, %v636, 0.0
      %v661 = vadd.f32 %v659, %v660
      %v662 = vsel %vm607, %v637, 0.0
      %v663 = vadd.f32 %v661, %v662
      %v664 = vsel %vm607, %v638, 0.0
      %v665 = vadd.f32 %v663, %v664
      %v666 = vsel %vm607, %v639, 0.0
      %v667 = vadd.f32 %v665, %v666
      %v668 = vsel %vm607, %v640, 0.0
      %v669 = vadd.f32 %v667, %v668
      %v670 = vsel %vm607, %v641, 0.0
      %v671 = vadd.f32 %v669, %v670
      %v672 = vsel %vm607, %v642, 0.0
      %v673 = vadd.f32 %v671, %v672
      %674 = vadd.xlane.f32.xlu0 %v673
      %v675 = vpop.xlane.xlu0 %674
      %v676 = vrot.slane %v675, 4
      %v677 = vadd.f32 %v675, %v676
      %v678 = vrot.slane %v677, 2
      %v679 = vadd.f32 %v677, %v678
      %v680 = vrot.slane %v679, 1
      %v681 = vadd.f32 %v679, %v680
      %s682 = vtos %v681
      %v683 = vstv %s682
      %684 = vst [vmem:[#allocation3] sm:$0xff] %v683
    $region13: #{tpu_custom_call.1} parent=1 // pred_fallthru
      _
    // Predicated region
    $region14: #{tpu_custom_call.1} parent=1 // pred_check
      _
    $region15: #{tpu_custom_call.1} parent=1 // pred_check_branch
      %686 = sbr.rel (0) target = $region17
    $region16: #{tpu_custom_call.1} parent=1 // pred_region
      %688 = vsyncadd [#allocation4], 0
      %s690 = sshll.u32 [#allocation3], 4
      %s691 = int_to_ptr.vmem [resolvable:$true] %s690
      %s692 = sshll.u32 %s1, 4
      %s693 = int_to_ptr.hbm [resolvable:$true] %s692
      %695 = dma.vmem_to_hbm [thread:$0]  %s691, 128, %s693, [#allocation4]
    $region17: #{tpu_custom_call.1} parent=1 // pred_fallthru
      _
    // Predicated region
    $region18: #{tpu_custom_call.1} parent=1 // pred_check
      _
    $region19: #{tpu_custom_call.1} parent=1 // pred_check_branch
      %697 = sbr.rel (0) target = $region21
    $region20: #{tpu_custom_call.1} parent=1 // pred_region
      %699 = dma.done [#allocation4], 128
    $region21: #{tpu_custom_call.1} parent=1 // pred_fallthru
      _
    %700 = vsyncpa [#allocation4], 1

</llo_original>
